<compile_context>
chip_gen: v7x
topology: tpu7x:2x2x1
jax: 0.10.0
libtpu: 0.0.40
codegen_flags: <defaults>
</compile_context>

<pallas_src>
import numpy as np

import jax
import jax.numpy as jnp
from jax.experimental import pallas as pl
from jax.experimental.pallas import tpu as pltpu

_LANES = 128
_SUBLANES = 8
_MAX_TILE_N = 32_768              # lane-dim elements per block (multiple of 128)
_TARGET_BLOCK_ELEMS = 256 * 1024  # ~1 MiB per f32 block (in+out dbl-buffered ~4 MiB)


def _drop_path_kernel(x_ref, scale_ref, o_ref):
    """One grid step == one (tile_b, tile_n) slab; scale is (tile_b, 1)."""
    o_ref[...] = x_ref[...] * scale_ref[...].astype(o_ref.dtype)


def _choose_tiles(batch: int, n: int):
    """Pick (tile_b, tile_n) that are legal BlockSpec dims and ~1 MiB f32."""
    tile_n = n if n <= _MAX_TILE_N else _MAX_TILE_N        # full dim OR 128-multiple
    desired_b = max(1, _TARGET_BLOCK_ELEMS // tile_n)
    if batch <= desired_b:
        tile_b = batch                                     # equals full dim -> legal
    else:
        tile_b = max((desired_b // _SUBLANES) * _SUBLANES, _SUBLANES)
        tile_b = min(tile_b, batch)                        # batch < 8 -> full dim
    return tile_b, tile_n


def _sample_scale(key, batch: int, keep_prob: float, scale_by_keep: bool):
    """Per-sample scale: Bernoulli(keep_prob), optionally divided by keep_prob."""
    keep = jax.random.bernoulli(key, p=keep_prob, shape=(batch,)).astype(jnp.float32)
    if scale_by_keep and keep_prob > 0.0:
        keep = keep * jnp.float32(1.0 / keep_prob)
    return keep


def drop_path_pallas(x, drop_prob: float = 0.0, training: bool = False,
                     scale_by_keep: bool = True, *, key=None):
    """Pallas implementation of timm-style drop_path (stochastic depth)."""
    if drop_prob == 0.0 or not training:
        return x
    if key is None:
        raise ValueError("drop_path_pallas needs a jax.random key when training")

    keep_prob = 1.0 - float(drop_prob)
    batch = x.shape[0]
    scale = _sample_scale(key, batch, keep_prob, scale_by_keep)

    if x.ndim == 1 or x.size == 0:
        # One element per sample (or empty): a kernel launch is pure overhead.
        return (x * scale.astype(x.dtype)).astype(x.dtype)

    n = int(np.prod(x.shape[1:]))
    xf = x.reshape(batch, n)                     # free for contiguous layouts

    # Pad only when the lane dim both needs tiling and is not 128-aligned, and
    # only to rows*128 (partial last blocks are handled by the cdiv grid).
    n_k = n
    if n > _MAX_TILE_N and n % _LANES != 0:
        n_k = pl.cdiv(n, _LANES) * _LANES
        xf = jnp.pad(xf, ((0, 0), (0, n_k - n)))

    tile_b, tile_n = _choose_tiles(batch, n_k)
    grid = (pl.cdiv(batch, tile_b), pl.cdiv(n_k, tile_n))

    out = pl.pallas_call(
        _drop_path_kernel,
        out_shape=jax.ShapeDtypeStruct((batch, n_k), x.dtype),
        grid_spec=pltpu.PrefetchScalarGridSpec(
            num_scalar_prefetch=0,
            grid=grid,
            in_specs=[
                pl.BlockSpec((tile_b, tile_n), lambda i, j: (i, j)),
                pl.BlockSpec((tile_b, 1), lambda i, j: (i, 0)),
            ],
            out_specs=pl.BlockSpec((tile_b, tile_n), lambda i, j: (i, j)),
        ),
        compiler_params=pltpu.CompilerParams(
            dimension_semantics=("parallel", "parallel")),
    )(xf, scale.reshape(batch, 1))

    if n_k != n:
        out = out[:, :n]
    return out.reshape(x.shape)


class DropPath:
    """Mirror of the PyTorch DropPath module (no trainable parameters)."""

    def __init__(self, drop_prob: float = 0.0, scale_by_keep: bool = True, *, key=None):
        self.drop_prob = drop_prob
        self.scale_by_keep = scale_by_keep
        self.training = True
        self._key = key if key is not None else jax.random.PRNGKey(0)

    def __call__(self, x, key=None):
        if self.drop_prob == 0.0 or not self.training:
            return x
        if key is None:
            # Resample the per-sample mask every forward call (torch semantics).
            self._key, key = jax.random.split(self._key)
        return drop_path_pallas(x, self.drop_prob, self.training,
                                self.scale_by_keep, key=key)


if __name__ == "__main__":
    root = jax.random.PRNGKey(0)

    def check(shape, dtype, drop_prob, mask_key, data_key):
        x = jax.random.normal(data_key, shape, dtype=jnp.float32).astype(dtype)
        y = jax.block_until_ready(
            drop_path_pallas(x, drop_prob, training=True, scale_by_keep=True,
                             key=mask_key))
        assert y.shape == x.shape and y.dtype == x.dtype
        keep_prob = 1.0 - drop_prob
        s = np.asarray(_sample_scale(mask_key, shape[0], keep_prob, True),
                       dtype=np.float32)
        expected = (np.asarray(x.astype(jnp.float32))
                    * s.reshape((-1,) + (1,) * (x.ndim - 1)))
        got = np.asarray(y.astype(jnp.float32))
        np.testing.assert_allclose(got, expected, rtol=1e-5, atol=1e-5)

    B, C, H, W = 2, 4, 16, 16
    key_data, key_mask = jax.random.split(root)
    x = jax.random.normal(key_data, (B, C, H, W), dtype=jnp.float32)

    # 1) inference / drop_prob == 0 path: identity.
    mod_eval = DropPath(drop_prob=0.5)
    mod_eval.training = False
    y_eval = jax.block_until_ready(mod_eval(x))
    assert np.array_equal(np.asarray(y_eval), np.asarray(x)), "eval must be identity"

    # 2) training path on the module's reference shape, exact vs reference.
    check((B, C, H, W), jnp.float32, 0.5, key_mask, key_data)

    # 3) each sample is either zeroed or scaled by exactly 1/keep_prob.
    mod = DropPath(drop_prob=0.5, key=jax.random.PRNGKey(7))
    y = jax.block_until_ready(mod(x))
    y_np, x_np = np.asarray(y), np.asarray(x)
    for b in range(B):
        ok = (np.allclose(y_np[b], 0.0)
              or np.allclose(y_np[b], x_np[b] * 2.0, rtol=1e-5, atol=1e-5))
        assert ok, f"sample {b}: not a valid drop-path output"

    # 4) bf16, unaligned small N, and multi-tile / partial-block shapes.
    keys = jax.random.split(root, 6)
    check((B, C, H, W), jnp.bfloat16, 0.5, keys[0], keys[1])
    check((3, 5, 7), jnp.float32, 0.4, keys[2], keys[3])        # N=35 (<128 lanes)
    check((10, 150, 256), jnp.float32, 0.5, keys[4], keys[5])   # partial blocks, both axes

    print("KERNEL_OK")
</pallas_src>

<mosaic_0001>
module attributes {stable_mosaic.version = 11 : i64} {
  func.func @_drop_path_kernel(%arg0: i32, %arg1: i32, %arg2: memref<2x1024xf32, #tpu.memory_space<vmem>>, %arg3: memref<2x1xf32, #tpu.memory_space<vmem>>, %arg4: memref<2x1024xf32, #tpu.memory_space<vmem>>) attributes {dimension_semantics = [#tpu.dimension_semantics<parallel>, #tpu.dimension_semantics<parallel>], iteration_bounds = array<i64: 1, 1>, scalar_prefetch = 0 : i64, scratch_operands = 0 : i64, tpu.core_type = #tpu.core_type<tc>, window_params = [{transform_indices = @transform_0, window_bounds = array<i64: 2, 1024>}, {transform_indices = @transform_1, window_bounds = array<i64: 2, 1>}, {transform_indices = @transform_2, window_bounds = array<i64: 2, 1024>}]} {
    %c0 = arith.constant 0 : index
    %c0_0 = arith.constant 0 : index
    %0 = vector.load %arg2[%c0, %c0_0] : memref<2x1024xf32, #tpu.memory_space<vmem>>, vector<2x1024xf32>
    %c0_1 = arith.constant 0 : index
    %c0_2 = arith.constant 0 : index
    %1 = vector.load %arg3[%c0_1, %c0_2] : memref<2x1xf32, #tpu.memory_space<vmem>>, vector<2x1xf32>
    %2 = vector.broadcast %1 : vector<2x1xf32> to vector<2x1024xf32>
    %3 = arith.mulf %0, %2 : vector<2x1024xf32>
    %c0_3 = arith.constant 0 : index
    %c0_4 = arith.constant 0 : index
    %4 = vector.load %arg4[%c0_3, %c0_4] : memref<2x1024xf32, #tpu.memory_space<vmem>>, vector<2x1024xf32>
    tpu.vector_store %arg4[%c0_3, %c0_4], %3 {strides = array<i32>} : memref<2x1024xf32, #tpu.memory_space<vmem>>, vector<2x1024xf32>,
    return
  }
  func.func @transform_0(%arg0: i32, %arg1: i32) -> (i32, i32) {
    %c0_i32 = arith.constant 0 : i32
    return %arg0, %arg1 : i32, i32
  }
  func.func @transform_1(%arg0: i32, %arg1: i32) -> (i32, i32) {
    %c0_i32 = arith.constant 0 : i32
    %c0_i32_0 = arith.constant 0 : i32
    return %arg0, %c0_i32 : i32, i32
  }
  func.func @transform_2(%arg0: i32, %arg1: i32) -> (i32, i32) {
    %c0_i32 = arith.constant 0 : i32
    return %arg0, %arg1 : i32, i32
  }
}

</mosaic_0001>

<llo_original>
// kernel: tpu_custom_call.1
$region0: #{tpu_custom_call.1}
  #allocation0 [shape = 'u32[]', space=smem, size = 0x4, offset = 0x4, fixed_abs, tag = 'smem constant byte address 0x4 - core index']
  #allocation1 [shape = 'u32[144,128]{1,0:T(1,128)}', space=vmem, size = 0x12000, scoped, tag = 'internal scratch']
  %s0 = inlined_call_operand.hbm [shape: f32[2,1024], index: 0, kind: input, shape index: {}]
  %s1 = inlined_call_operand.vmem [shape: f32[2,1], index: 1, kind: input, shape index: {}]
  %s2 = inlined_call_operand.hbm [shape: f32[2,1024], index: 2, kind: output, shape index: {}]
  %s3 = sld [smem:[#allocation0]]
  $region22: #{tpu_custom_call.1} parent=0
    _
  %s5 = ssub.s32 1, %s3
  %s6 = scalar_select 0, %s5, %s3
  $region1: #{tpu_custom_call.1} parent=0
    #allocation2 [shape = 'u8[8192]{0}', space=vmem, size = 0x2000, scoped, tag = 'input window, operand 0, single buffered']
    #allocation3 [shape = 's32[1]{0}', space=sflag, size = 0x4, scoped, tag = 'scoped memory for tpu_custom_call.1']
    #allocation4 [shape = 's32[1]{0}', space=sflag, size = 0x4, scoped, tag = 'scoped memory for tpu_custom_call.1']
    #allocation5 [shape = 'u8[8192]{0}', space=vmem, size = 0x2000, scoped, tag = 'output window, operand 0, single buffered']
    %7 = vsyncpa [#allocation3], 0
    %8 = vsyncpa [#allocation4], 0
    // Predicated region
    $region2: #{tpu_custom_call.1} parent=1 // pred_check
      _
    $region3: #{tpu_custom_call.1} parent=1 // pred_check_branch
      %10 = sbr.rel (0) target = $region5
    $region4: #{tpu_custom_call.1} parent=1 // pred_region
      %s12 = ssub.s32 256, 256
      %13 = vsyncadd [#allocation3], %s12
      %s15 = sshll.u32 [#allocation2], 4
      %s16 = int_to_ptr.vmem [resolvable:$true] %s15
      %18 = dma.hbm_to_vmem [thread:$0]  %s0, 256, %s16, [#allocation3]
    $region5: #{tpu_custom_call.1} parent=1 // pred_fallthru
      _
    // Predicated region
    $region6: #{tpu_custom_call.1} parent=1 // pred_check
      _
    $region7: #{tpu_custom_call.1} parent=1 // pred_check_branch
      %20 = sbr.rel (0) target = $region9
    $region8: #{tpu_custom_call.1} parent=1 // pred_region
      _
    $region9: #{tpu_custom_call.1} parent=1 // pred_fallthru
      _
    // Predicated region
    $region10: #{tpu_custom_call.1} parent=1 // pred_check
      _
    $region11: #{tpu_custom_call.1} parent=1 // pred_check_branch
      %22 = sbr.rel (0) target = $region13
    $region12: #{tpu_custom_call.1} parent=1 // pred_region
      %23 = dma.done [#allocation3], 256
    $region13: #{tpu_custom_call.1} parent=1 // pred_fallthru
      _
    %v24 = vld [vmem:[#allocation2] sm:$0xff]
    %v25 = vld [vmem:[#allocation2 + $0x8] sm:$0xff]
    %v26 = vld [vmem:[%s1] sm:$0x3]
    %28 = vset.pattern.permute.xlu0 0
    %29 = vperm.xlu0 %28, %v26
    %v30 = vpop.permute.xlu0 %29
    %v32 = vunpack.c.l.s4 269488144
    %v33 = vunpack.c.0.s8 %v32
    %v34 = vlaneseq
    %v35 = vshrl.u32 %v34, 7
    %v36 = vsub.s32 %v33, %v35
    %v37 = vrot.slane %v30, %v36
    %v39 = vmul.f32 %v24, %v37
    %v40 = vmul.f32 %v25, %v37
    %41 = vst [vmem:[#allocation5] sm:$0xff] %v39
    %42 = vst [vmem:[#allocation5 + $0x8] sm:$0xff] %v40
    // Predicated region
    $region14: #{tpu_custom_call.1} parent=1 // pred_check
      _
    $region15: #{tpu_custom_call.1} parent=1 // pred_check_branch
      %44 = sbr.rel (0) target = $region17
    $region16: #{tpu_custom_call.1} parent=1 // pred_region
      %s46 = ssub.s32 256, 256
      %47 = vsyncadd [#allocation4], %s46
      %s49 = sshll.u32 [#allocation5], 4
      %s50 = int_to_ptr.vmem [resolvable:$true] %s49
      %52 = dma.vmem_to_hbm [thread:$0]  %s50, 256, %s2, [#allocation4]
    $region17: #{tpu_custom_call.1} parent=1 // pred_fallthru
      _
    // Predicated region
    $region18: #{tpu_custom_call.1} parent=1 // pred_check
      _
    $region19: #{tpu_custom_call.1} parent=1 // pred_check_branch
      %54 = sbr.rel (0) target = $region21
    $region20: #{tpu_custom_call.1} parent=1 // pred_region
      %55 = dma.done [#allocation4], 256
    $region21: #{tpu_custom_call.1} parent=1 // pred_fallthru
      _
    %56 = vsyncpa [#allocation3], 1
    %57 = vsyncpa [#allocation4], 1

</llo_original>
